<compile_context>
chip_gen: v5e
topology: v5e:2x2
jax: 0.10.0
libtpu: 0.0.40
codegen_flags: <defaults>
</compile_context>

<pallas_src>
import jax
import jax.numpy as jnp
from jax.experimental import pallas as pl
from jax.experimental.pallas import tpu as pltpu

# Model dims (from DummyFeatureExtractor.__init__)
C_IN = 2      # Conv1d in channels
H1 = 16       # first conv out channels
C_OUT = 32    # second conv out channels
K = 3         # kernel size (padding=1 -> "same")


def feature_extractor_kernel(x_ref, w1_ref, b1_ref, w2_ref, b2_ref, o_ref):
    """One batch element per grid step, NCL layout (channels on sublanes, L on lanes).

    x_ref  : (1, C_IN, L)     input slab for one batch element
    w1_ref : (K, H1, C_IN)    first conv weights, tap-major
    b1_ref : (H1, 1)
    w2_ref : (C_OUT, K*H1)    second conv weights flattened (k-major, then h_in)
    b2_ref : (C_OUT, 1)
    o_ref  : (1, C_OUT, L)    output slab (lane-dense along L)
    """
    L = o_ref.shape[2]
    x = x_ref[0]                                               # (C_IN, L)

    # lane index along L, used to zero the wrapped column produced by roll
    lane = jax.lax.broadcasted_iota(jnp.int32, (1, L), 1)
    first_col = lane == 0
    last_col = lane == (L - 1)

    def shift_r(v):   # tap k=0: v_pad[l] = v[l-1], zero at l=0
        return jnp.where(first_col, 0.0, pltpu.roll(v, shift=1, axis=1))

    def shift_l(v):   # tap k=2: v_pad[l] = v[l+1], zero at l=L-1
        return jnp.where(last_col, 0.0, pltpu.roll(v, shift=L - 1, axis=1))

    # ---- Conv1d(2 -> 16, k=3, pad=1) + ReLU: 3 tap matmuls W(H1,C_IN) @ X(C_IN,L) ----
    taps = (shift_r(x), x, shift_l(x))
    h = b1_ref[...]                                            # (H1, 1) broadcasts over L
    for k in range(K):                                         # static unroll
        h = h + jnp.dot(w1_ref[k], taps[k],
                        preferred_element_type=jnp.float32)
    h = jnp.maximum(h, 0.0)                                    # (H1, L)

    # ---- Conv1d(16 -> 32, k=3, pad=1) + ReLU: single matmul on the (3*H1, L) stack ----
    hs = jnp.concatenate([shift_r(h), h, shift_l(h)], axis=0)  # (3*H1, L), aligned concat
    o = jnp.dot(w2_ref[...], hs,
                preferred_element_type=jnp.float32) + b2_ref[...]
    o_ref[0] = jnp.maximum(o, 0.0).astype(o_ref.dtype)


def dummy_feature_extractor(x_ncl, w1, b1, w2, b2):
    """x_ncl: (B, C_IN, L) float32  ->  (B, C_OUT, L) float32 (PyTorch NCL)."""
    B, _, L = x_ncl.shape

    # PyTorch Conv1d weight is (out_ch, in_ch, k).
    # conv1: tap-major (K, H1, C_IN); conv2: flattened (C_OUT, K*H1) with col = k*H1 + h_in.
    w1_t = jnp.transpose(w1, (2, 0, 1))                        # (K, H1, C_IN)  (tiny)
    w2_f = jnp.transpose(w2, (0, 2, 1)).reshape(C_OUT, K * H1) # (C_OUT, 3*H1)  (tiny)
    b1_c = b1.reshape(H1, 1)
    b2_c = b2.reshape(C_OUT, 1)

    return pl.pallas_call(
        feature_extractor_kernel,
        out_shape=jax.ShapeDtypeStruct((B, C_OUT, L), x_ncl.dtype),
        grid_spec=pltpu.PrefetchScalarGridSpec(
            num_scalar_prefetch=0,
            grid=(B,),
            in_specs=[
                pl.BlockSpec((1, C_IN, L), lambda b: (b, 0, 0)),
                pl.BlockSpec((K, H1, C_IN), lambda b: (0, 0, 0)),
                pl.BlockSpec((H1, 1), lambda b: (0, 0)),
                pl.BlockSpec((C_OUT, K * H1), lambda b: (0, 0)),
                pl.BlockSpec((C_OUT, 1), lambda b: (0, 0)),
            ],
            out_specs=pl.BlockSpec((1, C_OUT, L), lambda b: (b, 0, 0)),
        ),
        compiler_params=pltpu.CompilerParams(
            dimension_semantics=("parallel",)),
    )(x_ncl, w1_t, b1_c, w2_f, b2_c)


def _reference(x_ncl, w1, b1, w2, b2):
    """Pure-JAX reference of the PyTorch module (NCL throughout)."""
    B, _, L = x_ncl.shape

    def conv1d_same(x, w, b):
        xp = jnp.pad(x, ((0, 0), (0, 0), (1, 1)))
        out = jnp.broadcast_to(b[None, :, None], (B, w.shape[0], L)).astype(jnp.float32)
        for k in range(K):
            out = out + jnp.einsum("bcl,oc->bol", xp[:, :, k:k + L], w[:, :, k])
        return out

    h = jnp.maximum(conv1d_same(x_ncl, w1, b1), 0.0)
    o = jnp.maximum(conv1d_same(h, w2, b2), 0.0)
    return o


if __name__ == "__main__":
    key = jax.random.PRNGKey(0)
    k_x, k_w1, k_b1, k_w2, k_b2 = jax.random.split(key, 5)

    B, L = 2, 256   # L multiple of 128 -> lane-dense blocks
    x = jax.random.normal(k_x, (B, C_IN, L), dtype=jnp.float32)

    # Deterministic synthetic parameters (PyTorch Conv1d weight layout: (out, in, k))
    w1 = 0.1 * jax.random.normal(k_w1, (H1, C_IN, K), dtype=jnp.float32)
    b1 = 0.1 * jax.random.normal(k_b1, (H1,), dtype=jnp.float32)
    w2 = 0.1 * jax.random.normal(k_w2, (C_OUT, H1, K), dtype=jnp.float32)
    b2 = 0.1 * jax.random.normal(k_b2, (C_OUT,), dtype=jnp.float32)

    out = dummy_feature_extractor(x, w1, b1, w2, b2)
    out = jax.block_until_ready(out)

    ref = _reference(x, w1, b1, w2, b2)
    assert out.shape == (B, C_OUT, L), out.shape
    assert jnp.allclose(out, ref, atol=1e-4, rtol=1e-4), "mismatch vs reference"

    print("KERNEL_OK")
</pallas_src>

<mosaic_0001>
module attributes {stable_mosaic.version = 11 : i64} {
  func.func @feature_extractor_kernel(%arg0: i32, %arg1: memref<1x2x256xf32, #tpu.memory_space<vmem>>, %arg2: memref<3x16x2xf32, #tpu.memory_space<vmem>>, %arg3: memref<16x1xf32, #tpu.memory_space<vmem>>, %arg4: memref<32x48xf32, #tpu.memory_space<vmem>>, %arg5: memref<32x1xf32, #tpu.memory_space<vmem>>, %arg6: memref<1x32x256xf32, #tpu.memory_space<vmem>>) attributes {dimension_semantics = [#tpu.dimension_semantics<parallel>], iteration_bounds = array<i64: 2>, scalar_prefetch = 0 : i64, scratch_operands = 0 : i64, tpu.core_type = #tpu.core_type<tc>, window_params = [{transform_indices = @transform_0, window_bounds = array<i64: 1, 2, 256>}, {pipeline_mode = #tpu.pipeline_mode<synchronous>, transform_indices = @transform_1, window_bounds = array<i64: 3, 16, 2>}, {pipeline_mode = #tpu.pipeline_mode<synchronous>, transform_indices = @transform_2, window_bounds = array<i64: 16, 1>}, {pipeline_mode = #tpu.pipeline_mode<synchronous>, transform_indices = @transform_3, window_bounds = array<i64: 32, 48>}, {pipeline_mode = #tpu.pipeline_mode<synchronous>, transform_indices = @transform_4, window_bounds = array<i64: 32, 1>}, {transform_indices = @transform_5, window_bounds = array<i64: 1, 32, 256>}]} {
    %c0 = arith.constant 0 : index
    %c0_0 = arith.constant 0 : index
    %c0_1 = arith.constant 0 : index
    %0 = vector.load %arg1[%c0, %c0_0, %c0_1] : memref<1x2x256xf32, #tpu.memory_space<vmem>>, vector<1x2x256xf32>
    %1 = vector.shape_cast %0 : vector<1x2x256xf32> to vector<2x256xf32>
    %2 = tpu.iota {dimensions = array<i32: 1>} : vector<1x256xi32>
    %c0_i32 = arith.constant 0 : i32
    %3 = vector.broadcast %c0_i32 : i32 to vector<1x256xi32>
    %4 = arith.cmpi eq, %2, %3 : vector<1x256xi32>
    %c255_i32 = arith.constant 255 : i32
    %5 = vector.broadcast %c255_i32 : i32 to vector<1x256xi32>
    %6 = arith.cmpi eq, %2, %5 : vector<1x256xi32>
    %c1_i32 = arith.constant 1 : i32
    %7 = tpu.dynamic_rotate %1 by %c1_i32 dim 1 : vector<2x256xf32>, i32 -> vector<2x256xf32>
    %cst = arith.constant 0.000000e+00 : f32
    %8 = vector.shape_cast %4 : vector<1x256xi1> to vector<1x256xi1>
    %9 = vector.broadcast %8 : vector<1x256xi1> to vector<2x256xi1>
    %10 = vector.broadcast %cst : f32 to vector<2x256xf32>
    %11 = arith.select %9, %10, %7 : vector<2x256xi1>, vector<2x256xf32>
    %c255_i32_2 = arith.constant 255 : i32
    %12 = tpu.dynamic_rotate %1 by %c255_i32_2 dim 1 : vector<2x256xf32>, i32 -> vector<2x256xf32>
    %cst_3 = arith.constant 0.000000e+00 : f32
    %13 = vector.shape_cast %6 : vector<1x256xi1> to vector<1x256xi1>
    %14 = vector.broadcast %13 : vector<1x256xi1> to vector<2x256xi1>
    %15 = vector.broadcast %cst_3 : f32 to vector<2x256xf32>
    %16 = arith.select %14, %15, %12 : vector<2x256xi1>, vector<2x256xf32>
    %c0_4 = arith.constant 0 : index
    %c0_5 = arith.constant 0 : index
    %17 = vector.load %arg3[%c0_4, %c0_5] : memref<16x1xf32, #tpu.memory_space<vmem>>, vector<16x1xf32>
    %c0_6 = arith.constant 0 : index
    %c0_7 = arith.constant 0 : index
    %c0_8 = arith.constant 0 : index
    %18 = vector.load %arg2[%c0_6, %c0_7, %c0_8] : memref<3x16x2xf32, #tpu.memory_space<vmem>>, vector<1x16x2xf32>
    %19 = vector.shape_cast %18 : vector<1x16x2xf32> to vector<16x2xf32>
    %cst_9 = arith.constant dense<0.000000e+00> : vector<16x256xf32>
    %20 = tpu.matmul %19, %11, %cst_9 {dimension_numbers = #tpu.dot_dimension_numbers<[1], [0], [0], [1], [0, 0, 1, 1], [], []>} : vector<16x2xf32>, vector<2x256xf32>, vector<16x256xf32> -> vector<16x256xf32>
    %21 = vector.broadcast %17 : vector<16x1xf32> to vector<16x256xf32>
    %22 = arith.addf %21, %20 : vector<16x256xf32>
    %c1 = arith.constant 1 : index
    %c0_10 = arith.constant 0 : index
    %c0_11 = arith.constant 0 : index
    %23 = vector.load %arg2[%c1, %c0_10, %c0_11] : memref<3x16x2xf32, #tpu.memory_space<vmem>>, vector<1x16x2xf32>
    %24 = vector.shape_cast %23 : vector<1x16x2xf32> to vector<16x2xf32>
    %cst_12 = arith.constant dense<0.000000e+00> : vector<16x256xf32>
    %25 = tpu.matmul %24, %1, %cst_12 {dimension_numbers = #tpu.dot_dimension_numbers<[1], [0], [0], [1], [0, 0, 1, 1], [], []>} : vector<16x2xf32>, vector<2x256xf32>, vector<16x256xf32> -> vector<16x256xf32>
    %26 = arith.addf %22, %25 : vector<16x256xf32>
    %c2 = arith.constant 2 : index
    %c0_13 = arith.constant 0 : index
    %c0_14 = arith.constant 0 : index
    %27 = vector.load %arg2[%c2, %c0_13, %c0_14] : memref<3x16x2xf32, #tpu.memory_space<vmem>>, vector<1x16x2xf32>
    %28 = vector.shape_cast %27 : vector<1x16x2xf32> to vector<16x2xf32>
    %cst_15 = arith.constant dense<0.000000e+00> : vector<16x256xf32>
    %29 = tpu.matmul %28, %16, %cst_15 {dimension_numbers = #tpu.dot_dimension_numbers<[1], [0], [0], [1], [0, 0, 1, 1], [], []>} : vector<16x2xf32>, vector<2x256xf32>, vector<16x256xf32> -> vector<16x256xf32>
    %30 = arith.addf %26, %29 : vector<16x256xf32>
    %cst_16 = arith.constant 0.000000e+00 : f32
    %31 = vector.broadcast %cst_16 : f32 to vector<16x256xf32>
    %32 = arith.maximumf %30, %31 : vector<16x256xf32>
    %c1_i32_17 = arith.constant 1 : i32
    %33 = tpu.dynamic_rotate %32 by %c1_i32_17 dim 1 : vector<16x256xf32>, i32 -> vector<16x256xf32>
    %cst_18 = arith.constant 0.000000e+00 : f32
    %34 = vector.shape_cast %4 : vector<1x256xi1> to vector<1x256xi1>
    %35 = vector.broadcast %34 : vector<1x256xi1> to vector<16x256xi1>
    %36 = vector.broadcast %cst_18 : f32 to vector<16x256xf32>
    %37 = arith.select %35, %36, %33 : vector<16x256xi1>, vector<16x256xf32>
    %c255_i32_19 = arith.constant 255 : i32
    %38 = tpu.dynamic_rotate %32 by %c255_i32_19 dim 1 : vector<16x256xf32>, i32 -> vector<16x256xf32>
    %cst_20 = arith.constant 0.000000e+00 : f32
    %39 = vector.shape_cast %6 : vector<1x256xi1> to vector<1x256xi1>
    %40 = vector.broadcast %39 : vector<1x256xi1> to vector<16x256xi1>
    %41 = vector.broadcast %cst_20 : f32 to vector<16x256xf32>
    %42 = arith.select %40, %41, %38 : vector<16x256xi1>, vector<16x256xf32>
    %43 = tpu.concatenate %37, %32, %42 in 0 : vector<16x256xf32>, vector<16x256xf32>, vector<16x256xf32> -> vector<48x256xf32>
    %c0_21 = arith.constant 0 : index
    %c0_22 = arith.constant 0 : index
    %44 = vector.load %arg4[%c0_21, %c0_22] : memref<32x48xf32, #tpu.memory_space<vmem>>, vector<32x48xf32>
    %cst_23 = arith.constant dense<0.000000e+00> : vector<32x256xf32>
    %45 = tpu.matmul %44, %43, %cst_23 {dimension_numbers = #tpu.dot_dimension_numbers<[1], [0], [0], [1], [0, 0, 1, 1], [], []>} : vector<32x48xf32>, vector<48x256xf32>, vector<32x256xf32> -> vector<32x256xf32>
    %c0_24 = arith.constant 0 : index
    %c0_25 = arith.constant 0 : index
    %46 = vector.load %arg5[%c0_24, %c0_25] : memref<32x1xf32, #tpu.memory_space<vmem>>, vector<32x1xf32>
    %47 = vector.broadcast %46 : vector<32x1xf32> to vector<32x256xf32>
    %48 = arith.addf %45, %47 : vector<32x256xf32>
    %cst_26 = arith.constant 0.000000e+00 : f32
    %49 = vector.broadcast %cst_26 : f32 to vector<32x256xf32>
    %50 = arith.maximumf %48, %49 : vector<32x256xf32>
    %c0_27 = arith.constant 0 : index
    %c0_28 = arith.constant 0 : index
    %c0_29 = arith.constant 0 : index
    %51 = vector.load %arg6[%c0_27, %c0_28, %c0_29] : memref<1x32x256xf32, #tpu.memory_space<vmem>>, vector<1x32x256xf32>
    %52 = vector.shape_cast %51 : vector<1x32x256xf32> to vector<32x256xf32>
    %53 = vector.shape_cast %50 : vector<32x256xf32> to vector<1x32x256xf32>
    tpu.vector_store %arg6[%c0_27, %c0_28, %c0_29], %53 {strides = array<i32>} : memref<1x32x256xf32, #tpu.memory_space<vmem>>, vector<1x32x256xf32>,
    return
  }
  func.func @transform_0(%arg0: i32) -> (i32, i32, i32) {
    %c0_i32 = arith.constant 0 : i32
    %c0_i32_0 = arith.constant 0 : i32
    %c0_i32_1 = arith.constant 0 : i32
    return %arg0, %c0_i32, %c0_i32_0 : i32, i32, i32
  }
  func.func @transform_1(%arg0: i32) -> (i32, i32, i32) {
    %c0_i32 = arith.constant 0 : i32
    %c0_i32_0 = arith.constant 0 : i32
    %c0_i32_1 = arith.constant 0 : i32
    %c0_i32_2 = arith.constant 0 : i32
    return %c0_i32, %c0_i32_0, %c0_i32_1 : i32, i32, i32
  }
  func.func @transform_2(%arg0: i32) -> (i32, i32) {
    %c0_i32 = arith.constant 0 : i32
    %c0_i32_0 = arith.constant 0 : i32
    %c0_i32_1 = arith.constant 0 : i32
    return %c0_i32, %c0_i32_0 : i32, i32
  }
  func.func @transform_3(%arg0: i32) -> (i32, i32) {
    %c0_i32 = arith.constant 0 : i32
    %c0_i32_0 = arith.constant 0 : i32
    %c0_i32_1 = arith.constant 0 : i32
    return %c0_i32, %c0_i32_0 : i32, i32
  }
  func.func @transform_4(%arg0: i32) -> (i32, i32) {
    %c0_i32 = arith.constant 0 : i32
    %c0_i32_0 = arith.constant 0 : i32
    %c0_i32_1 = arith.constant 0 : i32
    return %c0_i32, %c0_i32_0 : i32, i32
  }
  func.func @transform_5(%arg0: i32) -> (i32, i32, i32) {
    %c0_i32 = arith.constant 0 : i32
    %c0_i32_0 = arith.constant 0 : i32
    %c0_i32_1 = arith.constant 0 : i32
    return %arg0, %c0_i32, %c0_i32_0 : i32, i32, i32
  }
}

</mosaic_0001>

<llo_original>
// kernel: tpu_custom_call.1
$region0: #{tpu_custom_call.1}
  #allocation0 [shape = 'u32[]', space=smem, size = 0x4, offset = 0x4, fixed_abs, tag = 'smem constant byte address 0x4 - core index']
  #allocation1 [shape = 'u32[72,128]{1,0:T(1,128)}', space=vmem, size = 0x9000, scoped, tag = 'internal scratch']
  %s0 = inlined_call_operand.vmem [shape: f32[2,2,256], index: 0, kind: input, shape index: {}]
  %s1 = inlined_call_operand.vmem [shape: f32[3,16,2], index: 1, kind: input, shape index: {}]
  %s2 = inlined_call_operand.vmem [shape: f32[16,1], index: 2, kind: input, shape index: {}]
  %s3 = inlined_call_operand.vmem [shape: f32[32,48], index: 3, kind: input, shape index: {}]
  %s4 = inlined_call_operand.vmem [shape: f32[32,1], index: 4, kind: input, shape index: {}]
  %s5 = inlined_call_operand.hbm [shape: f32[2,32,256], index: 5, kind: output, shape index: {}]
  %s6 = sld [smem:[#allocation0]]
  $region53: #{tpu_custom_call.1} parent=0
    _
  %s8 = ssub.s32 1, %s6
  %s9 = scalar_select 0, %s8, %s6
  $region1: #{tpu_custom_call.1} parent=0
    #allocation2 [shape = 'u8[65536]{0}', space=vmem, size = 0x10000, scoped, tag = 'output window, operand 0']
    #allocation3 [shape = 's32[2]{0}', space=sflag, size = 0x8, scoped, tag = 'scoped memory for tpu_custom_call.1']
    %10 = vsyncpa [#allocation3], 0
    %s11 = scalar_lea.sflag [#allocation3], 1
    %12 = vsyncpa %s11, 0
    loop: start=0, step=1, limit=4
    $region2: #{tpu_custom_call.1} parent=1 // loop_pre_header
      _
    $region3: #{tpu_custom_call.1} parent=1 // loop_header
      %s14 = sphi 0, %s18
      %p15 = scmp.ge.s32.totalorder %s14, 4
      %s24 = sphi 0, %s26
      %s27 = sphi 0, %s24
      %s28 = sphi 0, %s27
      %s44 = sphi 0, %s28
      %s48 = sphi 0, %s48
      %s50 = sphi 0, %s48
      %s51 = sphi 0, %s50
      %s65 = sphi 0, %s51
      %s69 = sphi 0, %s69
      %s71 = sphi 0, %s69
      %s72 = sphi 0, %s71
      %s86 = sphi 0, %s72
      %s90 = sphi 0, %s90
      %s92 = sphi 0, %s90
      %s93 = sphi 0, %s92
      %s107 = sphi 0, %s93
      %s111 = sphi 0, %s111
      %s113 = sphi 0, %s111
      %s114 = sphi 0, %s113
      %s128 = sphi 0, %s114
      %s134 = sphi 0, %s136
      %s137 = sphi 0, %s134
      %s138 = sphi 0, %s137
      %s154 = sphi 0, %s138
    $region4: #{tpu_custom_call.1} parent=1 // loop_header_branch
      %17 = sbr.rel (%p15) target = $region8
    $region5: #{tpu_custom_call.1} parent=1 // loop_body
      %s19 = ssub.s32 %s14, 1
      %s20 = ssub.s32 %s14, 2
      %s21 = sadd.s32 %s14, 1
      %s22 = ssub.s32 %s14, %s21
      %p23 = scmp.eq.s32.totalorder %s22, 0
      %s25 = sadd.s32 %s24, 1
      %s26 = scalar_select %p23, %s24, %s25
      %p29 = pneg %p23
      %p30 = scmp.eq.s32.totalorder %s14, 1
      %p31 = por %p29, %p30
      %p32 = scmp.ne.s32.totalorder %s24, %s27
      %p33 = scmp.eq.s32.totalorder %s14, 0
      %p34 = por %p32, %p33
      %p35 = scmp.ne.s32.totalorder %s24, %s27
      %p36 = scmp.eq.s32.totalorder %s19, 1
      %p37 = por %p35, %p36
      %p38 = scmp.ne.s32.totalorder %s27, %s28
      %p39 = scmp.eq.s32.totalorder %s19, 0
      %p40 = por %p38, %p39
      %p41 = scmp.ne.s32.totalorder %s27, %s28
      %p42 = scmp.eq.s32.totalorder %s20, 1
      %p43 = por %p41, %p42
      %p45 = scmp.ne.s32.totalorder %s28, %s44
      %p46 = scmp.eq.s32.totalorder %s20, 0
      %p47 = por %p45, %p46
      %s49 = sadd.s32 %s48, 1
      %p52 = scmp.eq.s32.totalorder %s14, 1
      %p53 = scmp.ne.s32.totalorder %s48, %s50
      %p54 = scmp.eq.s32.totalorder %s14, 0
      %p55 = por %p53, %p54
      %p56 = scmp.ne.s32.totalorder %s48, %s50
      %p57 = scmp.eq.s32.totalorder %s19, 1
      %p58 = por %p56, %p57
      %p59 = scmp.ne.s32.totalorder %s50, %s51
      %p60 = scmp.eq.s32.totalorder %s19, 0
      %p61 = por %p59, %p60
      %p62 = scmp.ne.s32.totalorder %s50, %s51
      %p63 = scmp.eq.s32.totalorder %s20, 1
      %p64 = por %p62, %p63
      %p66 = scmp.ne.s32.totalorder %s51, %s65
      %p67 = scmp.eq.s32.totalorder %s20, 0
      %p68 = por %p66, %p67
      %s70 = sadd.s32 %s69, 1
      %p73 = scmp.eq.s32.totalorder %s14, 1
      %p74 = scmp.ne.s32.totalorder %s69, %s71
      %p75 = scmp.eq.s32.totalorder %s14, 0
      %p76 = por %p74, %p75
      %p77 = scmp.ne.s32.totalorder %s69, %s71
      %p78 = scmp.eq.s32.totalorder %s19, 1
      %p79 = por %p77, %p78
      %p80 = scmp.ne.s32.totalorder %s71, %s72
      %p81 = scmp.eq.s32.totalorder %s19, 0
      %p82 = por %p80, %p81
      %p83 = scmp.ne.s32.totalorder %s71, %s72
      %p84 = scmp.eq.s32.totalorder %s20, 1
      %p85 = por %p83, %p84
      %p87 = scmp.ne.s32.totalorder %s72, %s86
      %p88 = scmp.eq.s32.totalorder %s20, 0
      %p89 = por %p87, %p88
      %s91 = sadd.s32 %s90, 1
      %p94 = scmp.eq.s32.totalorder %s14, 1
      %p95 = scmp.ne.s32.totalorder %s90, %s92
      %p96 = scmp.eq.s32.totalorder %s14, 0
      %p97 = por %p95, %p96
      %p98 = scmp.ne.s32.totalorder %s90, %s92
      %p99 = scmp.eq.s32.totalorder %s19, 1
      %p100 = por %p98, %p99
      %p101 = scmp.ne.s32.totalorder %s92, %s93
      %p102 = scmp.eq.s32.totalorder %s19, 0
      %p103 = por %p101, %p102
      %p104 = scmp.ne.s32.totalorder %s92, %s93
      %p105 = scmp.eq.s32.totalorder %s20, 1
      %p106 = por %p104, %p105
      %p108 = scmp.ne.s32.totalorder %s93, %s107
      %p109 = scmp.eq.s32.totalorder %s20, 0
      %p110 = por %p108, %p109
      %s112 = sadd.s32 %s111, 1
      %p115 = scmp.eq.s32.totalorder %s14, 1
      %p116 = scmp.ne.s32.totalorder %s111, %s113
      %p117 = scmp.eq.s32.totalorder %s14, 0
      %p118 = por %p116, %p117
      %p119 = scmp.ne.s32.totalorder %s111, %s113
      %p120 = scmp.eq.s32.totalorder %s19, 1
      %p121 = por %p119, %p120
      %p122 = scmp.ne.s32.totalorder %s113, %s114
      %p123 = scmp.eq.s32.totalorder %s19, 0
      %p124 = por %p122, %p123
      %p125 = scmp.ne.s32.totalorder %s113, %s114
      %p126 = scmp.eq.s32.totalorder %s20, 1
      %p127 = por %p125, %p126
      %p129 = scmp.ne.s32.totalorder %s114, %s128
      %p130 = scmp.eq.s32.totalorder %s20, 0
      %p131 = por %p129, %p130
      %s132 = ssub.s32 %s14, %s21
      %p133 = scmp.eq.s32.totalorder %s132, 0
      %s135 = sadd.s32 %s134, 1
      %s136 = scalar_select %p133, %s134, %s135
      %p139 = pneg %p133
      %p140 = scmp.eq.s32.totalorder %s14, 1
      %p141 = por %p139, %p140
      %p142 = scmp.ne.s32.totalorder %s134, %s137
      %p143 = scmp.eq.s32.totalorder %s14, 0
      %p144 = por %p142, %p143
      %p145 = scmp.ne.s32.totalorder %s134, %s137
      %p146 = scmp.eq.s32.totalorder %s19, 1
      %p147 = por %p145, %p146
      %p148 = scmp.ne.s32.totalorder %s137, %s138
      %p149 = scmp.eq.s32.totalorder %s19, 0
      %p150 = por %p148, %p149
      %p151 = scmp.ne.s32.totalorder %s137, %s138
      %p152 = scmp.eq.s32.totalorder %s20, 1
      %p153 = por %p151, %p152
      %p155 = scmp.ne.s32.totalorder %s138, %s154
      %p156 = scmp.eq.s32.totalorder %s20, 0
      %p157 = por %p155, %p156
      %p158 = scmp.le.s32.totalorder 1, %s14
      %p159 = scmp.lt.s32.totalorder %s14, 3
      %p160 = pnand %p158, %p159
      %p161 = pneg %p160
      // Predicated region
      $region9: #{tpu_custom_call.1} parent=5 // pred_check
        _
      $region10: #{tpu_custom_call.1} parent=5 // pred_check_branch
        %163 = sbr.rel (%p160) target = $region12
      $region11: #{tpu_custom_call.1} parent=5 // pred_region
        %s164 = ssub.s32 %s14, 1
        // Predicated region
        $region13: #{tpu_custom_call.1} parent=11 // pred_check
          %p165 = pneg %p61
        $region14: #{tpu_custom_call.1} parent=11 // pred_check_branch
          %167 = sbr.rel (%p165) target = $region16
        $region15: #{tpu_custom_call.1} parent=11 // pred_region
          _
        $region16: #{tpu_custom_call.1} parent=11 // pred_fallthru
          _
        // Predicated region
        $region17: #{tpu_custom_call.1} parent=11 // pred_check
          %p168 = pneg %p82
        $region18: #{tpu_custom_call.1} parent=11 // pred_check_branch
          %170 = sbr.rel (%p168) target = $region20
        $region19: #{tpu_custom_call.1} parent=11 // pred_region
          _
        $region20: #{tpu_custom_call.1} parent=11 // pred_fallthru
          _
        // Predicated region
        $region21: #{tpu_custom_call.1} parent=11 // pred_check
          %p171 = pneg %p103
        $region22: #{tpu_custom_call.1} parent=11 // pred_check_branch
          %173 = sbr.rel (%p171) target = $region24
        $region23: #{tpu_custom_call.1} parent=11 // pred_region
          _
        $region24: #{tpu_custom_call.1} parent=11 // pred_fallthru
          _
        // Predicated region
        $region25: #{tpu_custom_call.1} parent=11 // pred_check
          %p174 = pneg %p124
        $region26: #{tpu_custom_call.1} parent=11 // pred_check_branch
          %176 = sbr.rel (%p174) target = $region28
        $region27: #{tpu_custom_call.1} parent=11 // pred_region
          _
        $region28: #{tpu_custom_call.1} parent=11 // pred_fallthru
          _
      $region12: #{tpu_custom_call.1} parent=5 // pred_fallthru
        _
      %p177 = scmp.lt.s32.totalorder %s14, 2
      // Predicated region
      $region29: #{tpu_custom_call.1} parent=5 // pred_check
        %p178 = pneg %p177
      $region30: #{tpu_custom_call.1} parent=5 // pred_check_branch
        %180 = sbr.rel (%p178) target = $region32
      $region31: #{tpu_custom_call.1} parent=5 // pred_region
        // Predicated region
        $region33: #{tpu_custom_call.1} parent=31 // pred_check
          %p181 = pneg %p34
        $region34: #{tpu_custom_call.1} parent=31 // pred_check_branch
          %183 = sbr.rel (%p181) target = $region36
        $region35: #{tpu_custom_call.1} parent=31 // pred_region
          %p184 = scmp.lt.s32.totalorder %s14, 1
          %s185 = scalar_select %p184, %s14, 1
          %s186 = smul.addr %s185, 2
          %s187 = smul.addr %s186, 2
          %s188 = scalar_lea.vmem %s0, %s187
        $region36: #{tpu_custom_call.1} parent=31 // pred_fallthru
          _
      $region32: #{tpu_custom_call.1} parent=5 // pred_fallthru
        _
      %p189 = scmp.le.s32.totalorder 1, %s14
      %p190 = scmp.lt.s32.totalorder %s14, 3
      %p191 = pnand %p189, %p190
      %p192 = pneg %p191
      // Predicated region
      $region37: #{tpu_custom_call.1} parent=5 // pred_check
        _
      $region38: #{tpu_custom_call.1} parent=5 // pred_check_branch
        %194 = sbr.rel (%p191) target = $region40
      $region39: #{tpu_custom_call.1} parent=5 // pred_region
        %s195 = ssub.s32 %s14, 1
        %p196 = scmp.lt.s32.totalorder %s19, 1
        %s197 = scalar_select %p196, %s19, 1
        %s198 = smul.addr %s197, 2
        %s199 = smul.addr %s198, 2
        %s200 = scalar_lea.vmem %s0, %s199
        %p201 = pneg %p40
        %p202 = pneg %p37
        %p203 = pneg %p61
        %p204 = pneg %p58
        %p205 = pneg %p82
        %p206 = pneg %p79
        %p207 = pneg %p103
        %p208 = pneg %p100
        %p209 = pneg %p124
        %p210 = pneg %p121
        %p211 = pneg %p150
        %p212 = pneg %p147
        %s213 = sand.u32 %s137, 1
        %s214 = scalar_lea.sflag [#allocation3], %s213
        %s215 = sand.u32 %s137, 1
        %s216 = smul.addr %s215, 64
        %s217 = scalar_lea.vmem [#allocation2], %s216
        %p218 = scmp.lt.s32.totalorder %s19, 1
        %s219 = scalar_select %p218, %s19, 1
        %s220 = smul.addr %s219, 2
        %s221 = smul.addr %s220, 2
        %s222 = scalar_lea.vmem %s0, %s221
        %v223 = vld [vmem:[%s222] sm:$0xf]
        %v224 = vlaneseq
        %v225 = vand.u32 %v224, 127
        %v226 = vadd.s32 %v225, 128
        %vm227 = vcmp.eq.s32.totalorder %v225, 0
        %vm228 = vcmp.eq.s32.totalorder %v226, 0
        %vm229 = vcmp.eq.s32.totalorder %v225, 255
        %vm230 = vcmp.eq.s32.totalorder %v226, 255
        %232 = vst [vmem:[#allocation1] ss:$4 sm:$0xff] %v223
        %v233 = vld.sshfl [vmem:[#allocation1] sm:$0xff pattern:$0x73625140]
        %v234 = vld.sshfl [vmem:[#allocation1 + $0x8] sm:$0xff pattern:$0x73625140]
        %237 = vrot.lane.b32.xlu0 %v233, 1
        %v238 = vpop.permute.xlu0 %237
        %239 = vrot.lane.b32.xlu0 %v234, 1
        %v240 = vpop.permute.xlu0 %239
        %vm241 = vcmp.lt.s32.totalorder %v225, 1
        %v242 = vsel %vm241, %v238, %v240
        %v243 = vsel %vm241, %v240, %v238
        %v244 = vsel %vm227, 1, 0
        %v245 = vsel %vm228, 1, 0
        %vm246 = vcmp.eq.s32.totalorder %v244, 1
        %vm247 = vcmp.eq.s32.totalorder %v245, 1
        %v248 = vsel %vm246, 0.0, %v243
        %v249 = vsel %vm247, 0.0, %v242
        %250 = vst [vmem:[#allocation1] ss:$4 sm:$0xff] %v223
        %v251 = vld.sshfl [vmem:[#allocation1] sm:$0xff pattern:$0x73625140]
        %v252 = vld.sshfl [vmem:[#allocation1 + $0x8] sm:$0xff pattern:$0x73625140]
        %255 = vrot.lane.b32.xlu0 %v251, 127
        %v256 = vpop.permute.xlu0 %255
        %257 = vrot.lane.b32.xlu0 %v252, 127
        %v258 = vpop.permute.xlu0 %257
        %vm259 = vcmp.lt.s32.totalorder %v225, 127
        %v260 = vsel %vm259, %v256, %v258
        %v261 = vsel %vm259, %v258, %v256
        %v262 = vsel %vm229, 1, 0
        %v263 = vsel %vm230, 1, 0
        %vm264 = vcmp.eq.s32.totalorder %v262, 1
        %vm265 = vcmp.eq.s32.totalorder %v263, 1
        %v266 = vsel %vm264, 0.0, %v260
        %v267 = vsel %vm265, 0.0, %v261
        %v268 = vld [vmem:[%s2] sm:$0xff]
        %v269 = vld [vmem:[%s2 + $0x8] sm:$0xff]
        %v270 = vld [vmem:[%s1] sm:$0xff]
        %v271 = vld [vmem:[%s1 + $0x8] sm:$0xff]
        %vm272 = vcmask 15360
        %v274 = vsel %vm272, %v270, 0
        %v277 = vsel %vm272, %v271, 0
        %vm279 = vcmask 1041408
        %v281 = vsel %vm279, %v248, 0
        %v284 = vsel %vm279, %v249, 0
        %286 = vmatpush.msra.mxu0 0.0
        %287 = vmatpush.msra.mxu0 0.0
        %288 = vmatpush.msra.mxu0 0.0
        %289 = vmatpush.msra.mxu0 0.0
        %290 = vmatpush.msra.mxu0 0.0
        %291 = vmatpush.msra.mxu0 0.0
        %292 = vmatpush.msra.mxu0 0.0
        %293 = vmatpush.msra.mxu0 0.0
        %294 = vmatpush.msra.mxu0 0.0
        %295 = vmatpush.msra.mxu0 0.0
        %296 = vmatpush.msra.mxu0 0.0
        %297 = vmatpush.msra.mxu0 0.0
        %298 = vmatpush.msra.mxu0 0.0
        %299 = vmatpush.msra.mxu0 0.0
        %300 = vmatpush.msra.mxu0 0.0
        %301 = vmatpush.msra.mxu0 %v281
        %302 = vmatmul.f32.gmra.mxu0 %v274
        %v303 = vpop.f32.mrf.mxu0
        %v304 = vadd.f32 0.0, %v303
        %305 = vmatmul.f32.gmra.mxu0 %v277
        %v306 = vpop.f32.mrf.mxu0
        %v307 = vadd.f32 0.0, %v306
        %308 = vdwg.mxu0
        %309 = vmatpush.msra.mxu0 0.0
        %310 = vmatpush.msra.mxu0 0.0
        %311 = vmatpush.msra.mxu0 0.0
        %312 = vmatpush.msra.mxu0 0.0
        %313 = vmatpush.msra.mxu0 0.0
        %314 = vmatpush.msra.mxu0 0.0
        %315 = vmatpush.msra.mxu0 0.0
        %316 = vmatpush.msra.mxu0 0.0
        %317 = vmatpush.msra.mxu0 0.0
        %318 = vmatpush.msra.mxu0 0.0
        %319 = vmatpush.msra.mxu0 0.0
        %320 = vmatpush.msra.mxu0 0.0
        %321 = vmatpush.msra.mxu0 0.0
        %322 = vmatpush.msra.mxu0 0.0
        %323 = vmatpush.msra.mxu0 0.0
        %324 = vmatpush.msra.mxu0 %v284
        %325 = vmatmul.f32.gmra.mxu0 %v274
        %v326 = vpop.f32.mrf.mxu0
        %v327 = vadd.f32 0.0, %v326
        %328 = vmatmul.f32.gmra.mxu0 %v277
        %v329 = vpop.f32.mrf.mxu0
        %v330 = vadd.f32 0.0, %v329
        %331 = vdwg.mxu0
        %333 = vset.pattern.permute.xlu0 0
        %334 = vperm.xlu0 %333, %v268
        %v335 = vpop.permute.xlu0 %334
        %338 = vset.pattern.permute.xlu0 0
        %339 = vperm.xlu0 %338, %v269
        %v340 = vpop.permute.xlu0 %339
        %v342 = vadd.f32 %v335, %v304
        %v343 = vadd.f32 %v335, %v327
        %v344 = vadd.f32 %v340, %v307
        %v345 = vadd.f32 %v340, %v330
        %s346 = scalar_lea.vmem %s1, 16
        %v347 = vld [vmem:[%s346] sm:$0xff]
        %v348 = vld [vmem:[%s346 + $0x8] sm:$0xff]
        %349 = vst [vmem:[#allocation1] ss:$4 sm:$0xff] %v223
        %v350 = vld.sshfl [vmem:[#allocation1] sm:$0xff pattern:$0x73625140]
        %v351 = vld.sshfl [vmem:[#allocation1 + $0x8] sm:$0xff pattern:$0x73625140]
        %v353 = vsel %vm272, %v347, 0
        %v356 = vsel %vm272, %v348, 0
        %v358 = vsel %vm279, %v350, 0
        %v360 = vsel %vm279, %v351, 0
        %362 = vmatpush.msra.mxu0 0.0
        %363 = vmatpush.msra.mxu0 0.0
        %364 = vmatpush.msra.mxu0 0.0
        %365 = vmatpush.msra.mxu0 0.0
        %366 = vmatpush.msra.mxu0 0.0
        %367 = vmatpush.msra.mxu0 0.0
        %368 = vmatpush.msra.mxu0 0.0
        %369 = vmatpush.msra.mxu0 0.0
        %370 = vmatpush.msra.mxu0 0.0
        %371 = vmatpush.msra.mxu0 0.0
        %372 = vmatpush.msra.mxu0 0.0
        %373 = vmatpush.msra.mxu0 0.0
        %374 = vmatpush.msra.mxu0 0.0
        %375 = vmatpush.msra.mxu0 0.0
        %376 = vmatpush.msra.mxu0 0.0
        %377 = vmatpush.msra.mxu0 %v358
        %378 = vmatmul.f32.gmra.mxu0 %v353
        %v379 = vpop.f32.mrf.mxu0
        %v380 = vadd.f32 0.0, %v379
        %381 = vmatmul.f32.gmra.mxu0 %v356
        %v382 = vpop.f32.mrf.mxu0
        %v383 = vadd.f32 0.0, %v382
        %384 = vdwg.mxu0
        %385 = vmatpush.msra.mxu0 0.0
        %386 = vmatpush.msra.mxu0 0.0
        %387 = vmatpush.msra.mxu0 0.0
        %388 = vmatpush.msra.mxu0 0.0
        %389 = vmatpush.msra.mxu0 0.0
        %390 = vmatpush.msra.mxu0 0.0
        %391 = vmatpush.msra.mxu0 0.0
        %392 = vmatpush.msra.mxu0 0.0
        %393 = vmatpush.msra.mxu0 0.0
        %394 = vmatpush.msra.mxu0 0.0
        %395 = vmatpush.msra.mxu0 0.0
        %396 = vmatpush.msra.mxu0 0.0
        %397 = vmatpush.msra.mxu0 0.0
        %398 = vmatpush.msra.mxu0 0.0
        %399 = vmatpush.msra.mxu0 0.0
        %400 = vmatpush.msra.mxu0 %v360
        %401 = vmatmul.f32.gmra.mxu0 %v353
        %v402 = vpop.f32.mrf.mxu0
        %v403 = vadd.f32 0.0, %v402
        %404 = vmatmul.f32.gmra.mxu0 %v356
        %v405 = vpop.f32.mrf.mxu0
        %v406 = vadd.f32 0.0, %v405
        %407 = vdwg.mxu0
        %v408 = vadd.f32 %v342, %v380
        %v409 = vadd.f32 %v343, %v403
        %v410 = vadd.f32 %v344, %v383
        %v411 = vadd.f32 %v345, %v406
        %s412 = scalar_lea.vmem %s1, 32
        %v413 = vld [vmem:[%s412] sm:$0xff]
        %v414 = vld [vmem:[%s412 + $0x8] sm:$0xff]
        %v416 = vsel %vm272, %v413, 0
        %v419 = vsel %vm272, %v414, 0
        %v422 = vsel %vm279, %v266, 0
        %v425 = vsel %vm279, %v267, 0
        %427 = vmatpush.msra.mxu0 0.0
        %428 = vmatpush.msra.mxu0 0.0
        %429 = vmatpush.msra.mxu0 0.0
        %430 = vmatpush.msra.mxu0 0.0
        %431 = vmatpush.msra.mxu0 0.0
        %432 = vmatpush.msra.mxu0 0.0
        %433 = vmatpush.msra.mxu0 0.0
        %434 = vmatpush.msra.mxu0 0.0
        %435 = vmatpush.msra.mxu0 0.0
        %436 = vmatpush.msra.mxu0 0.0
        %437 = vmatpush.msra.mxu0 0.0
        %438 = vmatpush.msra.mxu0 0.0
        %439 = vmatpush.msra.mxu0 0.0
        %440 = vmatpush.msra.mxu0 0.0
        %441 = vmatpush.msra.mxu0 0.0
        %442 = vmatpush.msra.mxu0 %v422
        %443 = vmatmul.f32.gmra.mxu0 %v416
        %v444 = vpop.f32.mrf.mxu0
        %v445 = vadd.f32 0.0, %v444
        %446 = vmatmul.f32.gmra.mxu0 %v419
        %v447 = vpop.f32.mrf.mxu0
        %v448 = vadd.f32 0.0, %v447
        %449 = vdwg.mxu0
        %450 = vmatpush.msra.mxu0 0.0
        %451 = vmatpush.msra.mxu0 0.0
        %452 = vmatpush.msra.mxu0 0.0
        %453 = vmatpush.msra.mxu0 0.0
        %454 = vmatpush.msra.mxu0 0.0
        %455 = vmatpush.msra.mxu0 0.0
        %456 = vmatpush.msra.mxu0 0.0
        %457 = vmatpush.msra.mxu0 0.0
        %458 = vmatpush.msra.mxu0 0.0
        %459 = vmatpush.msra.mxu0 0.0
        %460 = vmatpush.msra.mxu0 0.0
        %461 = vmatpush.msra.mxu0 0.0
        %462 = vmatpush.msra.mxu0 0.0
        %463 = vmatpush.msra.mxu0 0.0
        %464 = vmatpush.msra.mxu0 0.0
        %465 = vmatpush.msra.mxu0 %v425
        %466 = vmatmul.f32.gmra.mxu0 %v416
        %v467 = vpop.f32.mrf.mxu0
        %v468 = vadd.f32 0.0, %v467
        %469 = vmatmul.f32.gmra.mxu0 %v419
        %v470 = vpop.f32.mrf.mxu0
        %v471 = vadd.f32 0.0, %v470
        %472 = vdwg.mxu0
        %v473 = vadd.f32 %v408, %v445
        %v474 = vadd.f32 %v409, %v468
        %v475 = vadd.f32 %v410, %v448
        %v476 = vadd.f32 %v411, %v471
        %v477 = vmax.f32 %v473, 0.0
        %v478 = vmax.f32 %v474, 0.0
        %v479 = vmax.f32 %v475, 0.0
        %v480 = vmax.f32 %v476, 0.0
        %481 = vrot.lane.b32.xlu0 %v477, 1
        %v482 = vpop.permute.xlu0 %481
        %483 = vrot.lane.b32.xlu0 %v479, 1
        %v484 = vpop.permute.xlu0 %483
        %485 = vrot.lane.b32.xlu0 %v478, 1
        %v486 = vpop.permute.xlu0 %485
        %487 = vrot.lane.b32.xlu0 %v480, 1
        %v488 = vpop.permute.xlu0 %487
        %v489 = vsel %vm241, %v482, %v486
        %v490 = vsel %vm241, %v484, %v488
        %v491 = vsel %vm241, %v486, %v482
        %v492 = vsel %vm241, %v488, %v484
        %v493 = vsel %vm246, 0.0, %v491
        %v494 = vsel %vm247, 0.0, %v489
        %v495 = vsel %vm246, 0.0, %v492
        %v496 = vsel %vm247, 0.0, %v490
        %497 = vrot.lane.b32.xlu0 %v477, 127
        %v498 = vpop.permute.xlu0 %497
        %499 = vrot.lane.b32.xlu0 %v479, 127
        %v500 = vpop.permute.xlu0 %499
        %501 = vrot.lane.b32.xlu0 %v478, 127
        %v502 = vpop.permute.xlu0 %501
        %503 = vrot.lane.b32.xlu0 %v480, 127
        %v504 = vpop.permute.xlu0 %503
        %v505 = vsel %vm259, %v498, %v502
        %v506 = vsel %vm259, %v500, %v504
        %v507 = vsel %vm259, %v502, %v498
        %v508 = vsel %vm259, %v504, %v500
        %v509 = vsel %vm264, 0.0, %v505
        %v510 = vsel %vm265, 0.0, %v507
        %v511 = vsel %vm264, 0.0, %v506
        %v512 = vsel %vm265, 0.0, %v508
        %v513 = vld [vmem:[%s3] sm:$0xff]
        %v514 = vld [vmem:[%s3 + $0x8] sm:$0xff]
        %v515 = vld [vmem:[%s3 + $0x10] sm:$0xff]
        %v516 = vld [vmem:[%s3 + $0x18] sm:$0xff]
        %v517 = vld [vmem:[%s4] sm:$0xff]
        %v518 = vld [vmem:[%s4 + $0x8] sm:$0xff]
        %v519 = vld [vmem:[%s4 + $0x10] sm:$0xff]
        %v520 = vld [vmem:[%s4 + $0x18] sm:$0xff]
        %522 = vset.pattern.permute.xlu0 0
        %523 = vperm.xlu0 %522, %v517
        %v524 = vpop.permute.xlu0 %523
        %527 = vset.pattern.permute.xlu0 0
        %528 = vperm.xlu0 %527, %v518
        %v529 = vpop.permute.xlu0 %528
        %532 = vset.pattern.permute.xlu0 0
        %533 = vperm.xlu0 %532, %v519
        %v534 = vpop.permute.xlu0 %533
        %537 = vset.pattern.permute.xlu0 0
        %538 = vperm.xlu0 %537, %v520
        %v539 = vpop.permute.xlu0 %538
        %vm541 = vcmask 392192
        %v543 = vsel %vm541, %v513, 0
        %v546 = vsel %vm541, %v514, 0
        %v549 = vsel %vm541, %v515, 0
        %v552 = vsel %vm541, %v516, 0
        %554 = vmatpush.msra.mxu0 0.0
        %555 = vmatpush.msra.mxu0 0.0
        %556 = vmatpush.msra.mxu0 0.0
        %557 = vmatpush.msra.mxu0 0.0
        %558 = vmatpush.msra.mxu0 0.0
        %559 = vmatpush.msra.mxu0 0.0
        %560 = vmatpush.msra.mxu0 0.0
        %561 = vmatpush.msra.mxu0 0.0
        %562 = vmatpush.msra.mxu0 0.0
        %563 = vmatpush.msra.mxu0 0.0
        %564 = vmatpush.msra.mxu0 %v511
        %565 = vmatpush.msra.mxu0 %v509
        %566 = vmatpush.msra.mxu0 %v479
        %567 = vmatpush.msra.mxu0 %v477
        %568 = vmatpush.msra.mxu0 %v495
        %569 = vmatpush.msra.mxu0 %v493
        %570 = vmatmul.f32.gmra.mxu0 %v543
        %v571 = vpop.f32.mrf.mxu0
        %v572 = vadd.f32 %v524, %v571
        %573 = vmatmul.f32.gmra.mxu0 %v546
        %v574 = vpop.f32.mrf.mxu0
        %v575 = vadd.f32 %v529, %v574
        %576 = vmatmul.f32.gmra.mxu0 %v549
        %v577 = vpop.f32.mrf.mxu0
        %v578 = vadd.f32 %v534, %v577
        %579 = vmatmul.f32.gmra.mxu0 %v552
        %v580 = vpop.f32.mrf.mxu0
        %v581 = vadd.f32 %v539, %v580
        %582 = vdwg.mxu0
        %583 = vmatpush.msra.mxu0 0.0
        %584 = vmatpush.msra.mxu0 0.0
        %585 = vmatpush.msra.mxu0 0.0
        %586 = vmatpush.msra.mxu0 0.0
        %587 = vmatpush.msra.mxu0 0.0
        %588 = vmatpush.msra.mxu0 0.0
        %589 = vmatpush.msra.mxu0 0.0
        %590 = vmatpush.msra.mxu0 0.0
        %591 = vmatpush.msra.mxu0 0.0
        %592 = vmatpush.msra.mxu0 0.0
        %593 = vmatpush.msra.mxu0 %v512
        %594 = vmatpush.msra.mxu0 %v510
        %595 = vmatpush.msra.mxu0 %v480
        %596 = vmatpush.msra.mxu0 %v478
        %597 = vmatpush.msra.mxu0 %v496
        %598 = vmatpush.msra.mxu0 %v494
        %599 = vmatmul.f32.gmra.mxu0 %v543
        %v600 = vpop.f32.mrf.mxu0
        %v601 = vadd.f32 %v524, %v600
        %602 = vmatmul.f32.gmra.mxu0 %v546
        %v603 = vpop.f32.mrf.mxu0
        %v604 = vadd.f32 %v529, %v603
        %605 = vmatmul.f32.gmra.mxu0 %v549
        %v606 = vpop.f32.mrf.mxu0
        %v607 = vadd.f32 %v534, %v606
        %608 = vmatmul.f32.gmra.mxu0 %v552
        %v609 = vpop.f32.mrf.mxu0
        %v610 = vadd.f32 %v539, %v609
        %611 = vdwg.mxu0
        %v612 = vmax.f32 %v572, 0.0
        %v613 = vmax.f32 %v601, 0.0
        %v614 = vmax.f32 %v575, 0.0
        %v615 = vmax.f32 %v604, 0.0
        %v616 = vmax.f32 %v578, 0.0
        %v617 = vmax.f32 %v607, 0.0
        %v618 = vmax.f32 %v581, 0.0
        %v619 = vmax.f32 %v610, 0.0
        %620 = vst [vmem:[%s217] sm:$0xff] %v612
        %621 = vst [vmem:[%s217 + $0x8] sm:$0xff] %v613
        %622 = vst [vmem:[%s217 + $0x10] sm:$0xff] %v614
        %623 = vst [vmem:[%s217 + $0x18] sm:$0xff] %v615
        %624 = vst [vmem:[%s217 + $0x20] sm:$0xff] %v616
        %625 = vst [vmem:[%s217 + $0x28] sm:$0xff] %v617
        %626 = vst [vmem:[%s217 + $0x30] sm:$0xff] %v618
        %627 = vst [vmem:[%s217 + $0x38] sm:$0xff] %v619
        %s628 = sand.u32 %s137, 1
        %s629 = scalar_lea.sflag [#allocation3], %s628
        %s630 = sand.u32 %s137, 1
        %s631 = smul.addr %s630, 64
        %s632 = scalar_lea.vmem [#allocation2], %s631
        // Predicated region
        $region41: #{tpu_custom_call.1} parent=39 // pred_check
          %p633 = pneg %p147
        $region42: #{tpu_custom_call.1} parent=39 // pred_check_branch
          %635 = sbr.rel (%p633) target = $region44
        $region43: #{tpu_custom_call.1} parent=39 // pred_region
          %637 = vsyncadd %s629, 0
          %s638 = smul.addr %s19, 8
          %s639 = smul.addr %s638, 8
          %s640 = scalar_lea.hbm %s5, %s639
          %s641 = sshll.u32 %s632, 4
          %s642 = int_to_ptr.vmem [resolvable:$true] %s641
          %s643 = sshll.u32 %s640, 4
          %s644 = int_to_ptr.hbm [resolvable:$true] %s643
          %649 = dma.vmem_to_hbm [thread:$0]  %s642, 1024, %s644, %s629, 256, 256, 16
        $region44: #{tpu_custom_call.1} parent=39 // pred_fallthru
          _
      $region40: #{tpu_custom_call.1} parent=5 // pred_fallthru
        _
      %p650 = scmp.le.s32.totalorder 2, %s14
      // Predicated region
      $region45: #{tpu_custom_call.1} parent=5 // pred_check
        %p651 = pneg %p650
      $region46: #{tpu_custom_call.1} parent=5 // pred_check_branch
        %653 = sbr.rel (%p651) target = $region48
      $region47: #{tpu_custom_call.1} parent=5 // pred_region
        %s654 = ssub.s32 %s14, 2
        // Predicated region
        $region49: #{tpu_custom_call.1} parent=47 // pred_check
          %p655 = pneg %p153
        $region50: #{tpu_custom_call.1} parent=47 // pred_check_branch
          %657 = sbr.rel (%p655) target = $region52
        $region51: #{tpu_custom_call.1} parent=47 // pred_region
          %s658 = sand.u32 %s138, 1
          %s659 = scalar_lea.sflag [#allocation3], %s658
          %s660 = sand.u32 %s138, 1
          %s661 = smul.addr %s660, 64
          %s662 = scalar_lea.vmem [#allocation2], %s661
          %664 = dma.done %s659, 1024
        $region52: #{tpu_custom_call.1} parent=47 // pred_fallthru
          _
      $region48: #{tpu_custom_call.1} parent=5 // pred_fallthru
        _
    $region6: #{tpu_custom_call.1} parent=1 // loop_footer
      %s18 = sadd.s32 1, %s14
    $region7: #{tpu_custom_call.1} parent=1 // loop_footer_branch
      %13 = sbr.rel target = $region3
    $region8: #{tpu_custom_call.1} parent=1 // loop_exit
      _
    %665 = vsyncpa [#allocation3], 1
    %s666 = scalar_lea.sflag [#allocation3], 1
    %667 = vsyncpa %s666, 1

</llo_original>
